<compile_context>
chip_gen: v7x
topology: tpu7x:2x2x1
jax: 0.10.0
libtpu: 0.0.40
codegen_flags: <defaults>
</compile_context>

<pallas_src>
import jax
import jax.numpy as jnp
from jax.experimental import pallas as pl
from jax.experimental.pallas import tpu as pltpu

HIDDEN = 64


def _round_up(n, m):
    return ((n + m - 1) // m) * m


def _accident_predictor_kernel(x_ref, w1_ref, b1_ref, w2_ref, b2_ref, o_ref):
    # dropout(p=0, training=False) is the identity -> not materialized.
    # dense1 (bf16 x bf16 -> f32 acc) + bias + relu, all in f32 on the VPU.
    h = jnp.dot(x_ref[...], w1_ref[...], preferred_element_type=jnp.float32)
    h = jnp.maximum(h + b1_ref[...], 0.0)            # (TB, 64) + (1, 64)
    # dense2 on the lane-padded N dim (full 128-lane store, no masking).
    out = jnp.dot(h.astype(w2_ref.dtype), w2_ref[...],
                  preferred_element_type=jnp.float32)
    o_ref[...] = (out + b2_ref[...]).astype(o_ref.dtype)


def accident_predictor(x, w1, b1, w2, b2, *, batch_tile=1024):
    """x: (B, input_dim). w1: (input_dim, 64), b1: (64,) or (1, 64),
    w2: (64, output_dim), b2: (output_dim,) or (1, output_dim).
    Returns (B, output_dim) float32."""
    B, input_dim = x.shape
    hidden = w1.shape[1]
    output_dim = w2.shape[1]

    # bf16 operands halve HBM traffic (kernel is memory-bound, AI ~30 f/B);
    # accumulation stays f32 inside the kernel.
    xb = x.astype(jnp.bfloat16)
    w1b = w1.astype(jnp.bfloat16)
    w2b = w2.astype(jnp.bfloat16)
    b1r = jnp.reshape(b1, (1, hidden)).astype(jnp.float32)
    b2r = jnp.reshape(b2, (1, output_dim)).astype(jnp.float32)

    # Lane-dense output: pad the layer-2 N dim up to a multiple of 128 so the
    # output store is an unmasked full-lane vst. Padded columns compute
    # h @ 0 + 0 = 0 and are sliced off below.
    n_pad = _round_up(max(output_dim, 128), 128)
    if n_pad != output_dim:
        w2b = jnp.pad(w2b, ((0, 0), (0, n_pad - output_dim)))
        b2r = jnp.pad(b2r, ((0, 0), (0, n_pad - output_dim)))

    # Large batch tiles amortize per-grid-step overhead and fill the MXU M
    # dim. Pad B instead of asserting divisibility (zero rows are harmless
    # and are sliced off below).
    tile = _round_up(min(batch_tile, _round_up(B, 8)), 8)
    Bp = _round_up(B, tile)
    if Bp != B:
        xb = jnp.pad(xb, ((0, Bp - B), (0, 0)))

    grid = (Bp // tile,)

    out = pl.pallas_call(
        _accident_predictor_kernel,
        out_shape=jax.ShapeDtypeStruct((Bp, n_pad), jnp.float32),
        grid_spec=pltpu.PrefetchScalarGridSpec(
            num_scalar_prefetch=0,
            grid=grid,
            in_specs=[
                # x tiled along batch; feature dim is a full-extent block.
                pl.BlockSpec((tile, input_dim), lambda i: (i, 0)),
                # Weights / biases stay resident across grid steps.
                pl.BlockSpec((input_dim, hidden), lambda i: (0, 0)),
                pl.BlockSpec((1, hidden), lambda i: (0, 0)),
                pl.BlockSpec((hidden, n_pad), lambda i: (0, 0)),
                pl.BlockSpec((1, n_pad), lambda i: (0, 0)),
            ],
            out_specs=pl.BlockSpec((tile, n_pad), lambda i: (i, 0)),
        ),
        compiler_params=pltpu.CompilerParams(
            dimension_semantics=("parallel",)),
    )(xb, w1b, b1r, w2b, b2r)

    return out[:B, :output_dim]


def init_params(key, input_dim, output_dim):
    """Synthetic init mirroring nn.Linear shapes (weights pre-transposed to
    (in_features, out_features) so the kernel computes x @ W + b)."""
    k1, k2, k3, k4 = jax.random.split(key, 4)
    bound1 = 1.0 / jnp.sqrt(input_dim)
    bound2 = 1.0 / jnp.sqrt(HIDDEN)
    w1 = jax.random.uniform(k1, (input_dim, HIDDEN), jnp.float32, -bound1, bound1)
    b1 = jax.random.uniform(k2, (1, HIDDEN), jnp.float32, -bound1, bound1)
    w2 = jax.random.uniform(k3, (HIDDEN, output_dim), jnp.float32, -bound2, bound2)
    b2 = jax.random.uniform(k4, (1, output_dim), jnp.float32, -bound2, bound2)
    return w1, b1, w2, b2


def reference_same_precision(x, w1, b1, w2, b2):
    """Reference with the kernel's precision policy (bf16 operands, f32 acc)."""
    xb = x.astype(jnp.bfloat16)
    w1b = w1.astype(jnp.bfloat16)
    w2b = w2.astype(jnp.bfloat16)
    h = jnp.maximum(
        jnp.dot(xb, w1b, preferred_element_type=jnp.float32) + b1, 0.0)
    return jnp.dot(h.astype(jnp.bfloat16), w2b,
                   preferred_element_type=jnp.float32) + b2


def reference_f32(x, w1, b1, w2, b2):
    h = jnp.maximum(x @ w1 + b1, 0.0)
    return h @ w2 + b2


if __name__ == "__main__":
    key = jax.random.PRNGKey(0)
    kx, kp = jax.random.split(key)

    B, input_dim, output_dim = 16, 32, 2
    x = jax.random.normal(kx, (B, input_dim), jnp.float32)
    w1, b1, w2, b2 = init_params(kp, input_dim, output_dim)

    out = jax.jit(accident_predictor)(x, w1, b1, w2, b2)
    out = jax.block_until_ready(out)
    assert out.shape == (B, output_dim)

    # Tight check against a reference using the identical precision policy.
    ref_bf16 = reference_same_precision(x, w1, b1, w2, b2)
    assert jnp.allclose(out, ref_bf16, atol=1e-5, rtol=1e-5), \
        "mismatch vs same-precision reference"

    # Loose check against the full-f32 PyTorch-equivalent forward.
    ref_f32 = reference_f32(x, w1, b1, w2, b2)
    assert jnp.allclose(out, ref_f32, atol=5e-2, rtol=5e-2), \
        "mismatch vs f32 reference"

    print("KERNEL_OK")
</pallas_src>

<mosaic_0001>
module attributes {stable_mosaic.version = 11 : i64} {
  func.func @_accident_predictor_kernel(%arg0: i32, %arg1: memref<16x32xbf16, #tpu.memory_space<vmem>>, %arg2: memref<32x64xbf16, #tpu.memory_space<vmem>>, %arg3: memref<1x64xf32, #tpu.memory_space<vmem>>, %arg4: memref<64x128xbf16, #tpu.memory_space<vmem>>, %arg5: memref<1x128xf32, #tpu.memory_space<vmem>>, %arg6: memref<16x128xf32, #tpu.memory_space<vmem>>) attributes {dimension_semantics = [#tpu.dimension_semantics<parallel>], iteration_bounds = array<i64: 1>, scalar_prefetch = 0 : i64, scratch_operands = 0 : i64, tpu.core_type = #tpu.core_type<tc>, window_params = [{transform_indices = @transform_0, window_bounds = array<i64: 16, 32>}, {pipeline_mode = #tpu.pipeline_mode<synchronous>, transform_indices = @transform_1, window_bounds = array<i64: 32, 64>}, {pipeline_mode = #tpu.pipeline_mode<synchronous>, transform_indices = @transform_2, window_bounds = array<i64: 1, 64>}, {pipeline_mode = #tpu.pipeline_mode<synchronous>, transform_indices = @transform_3, window_bounds = array<i64: 64, 128>}, {pipeline_mode = #tpu.pipeline_mode<synchronous>, transform_indices = @transform_4, window_bounds = array<i64: 1, 128>}, {transform_indices = @transform_5, window_bounds = array<i64: 16, 128>}]} {
    %c0 = arith.constant 0 : index
    %c0_0 = arith.constant 0 : index
    %0 = vector.load %arg1[%c0, %c0_0] : memref<16x32xbf16, #tpu.memory_space<vmem>>, vector<16x32xbf16>
    %c0_1 = arith.constant 0 : index
    %c0_2 = arith.constant 0 : index
    %1 = vector.load %arg2[%c0_1, %c0_2] : memref<32x64xbf16, #tpu.memory_space<vmem>>, vector<32x64xbf16>
    %cst = arith.constant dense<0.000000e+00> : vector<16x64xf32>
    %2 = tpu.matmul %0, %1, %cst {dimension_numbers = #tpu.dot_dimension_numbers<[1], [0], [0], [1], [0, 0, 1, 1], [], []>} : vector<16x32xbf16>, vector<32x64xbf16>, vector<16x64xf32> -> vector<16x64xf32>
    %c0_3 = arith.constant 0 : index
    %c0_4 = arith.constant 0 : index
    %3 = vector.load %arg3[%c0_3, %c0_4] : memref<1x64xf32, #tpu.memory_space<vmem>>, vector<1x64xf32>
    %4 = vector.broadcast %3 : vector<1x64xf32> to vector<16x64xf32>
    %5 = arith.addf %2, %4 : vector<16x64xf32>
    %cst_5 = arith.constant 0.000000e+00 : f32
    %6 = vector.broadcast %cst_5 : f32 to vector<16x64xf32>
    %7 = arith.maximumf %5, %6 : vector<16x64xf32>
    %8 = arith.truncf %7 : vector<16x64xf32> to vector<16x64xbf16>
    %c0_6 = arith.constant 0 : index
    %c0_7 = arith.constant 0 : index
    %9 = vector.load %arg4[%c0_6, %c0_7] : memref<64x128xbf16, #tpu.memory_space<vmem>>, vector<64x128xbf16>
    %cst_8 = arith.constant dense<0.000000e+00> : vector<16x128xf32>
    %10 = tpu.matmul %8, %9, %cst_8 {dimension_numbers = #tpu.dot_dimension_numbers<[1], [0], [0], [1], [0, 0, 1, 1], [], []>} : vector<16x64xbf16>, vector<64x128xbf16>, vector<16x128xf32> -> vector<16x128xf32>
    %c0_9 = arith.constant 0 : index
    %c0_10 = arith.constant 0 : index
    %11 = vector.load %arg5[%c0_9, %c0_10] : memref<1x128xf32, #tpu.memory_space<vmem>>, vector<1x128xf32>
    %12 = vector.broadcast %11 : vector<1x128xf32> to vector<16x128xf32>
    %13 = arith.addf %10, %12 : vector<16x128xf32>
    %c0_11 = arith.constant 0 : index
    %c0_12 = arith.constant 0 : index
    %14 = vector.load %arg6[%c0_11, %c0_12] : memref<16x128xf32, #tpu.memory_space<vmem>>, vector<16x128xf32>
    tpu.vector_store %arg6[%c0_11, %c0_12], %13 {strides = array<i32>} : memref<16x128xf32, #tpu.memory_space<vmem>>, vector<16x128xf32>,
    return
  }
  func.func @transform_0(%arg0: i32) -> (i32, i32) {
    %c0_i32 = arith.constant 0 : i32
    %c0_i32_0 = arith.constant 0 : i32
    return %arg0, %c0_i32 : i32, i32
  }
  func.func @transform_1(%arg0: i32) -> (i32, i32) {
    %c0_i32 = arith.constant 0 : i32
    %c0_i32_0 = arith.constant 0 : i32
    %c0_i32_1 = arith.constant 0 : i32
    return %c0_i32, %c0_i32_0 : i32, i32
  }
  func.func @transform_2(%arg0: i32) -> (i32, i32) {
    %c0_i32 = arith.constant 0 : i32
    %c0_i32_0 = arith.constant 0 : i32
    %c0_i32_1 = arith.constant 0 : i32
    return %c0_i32, %c0_i32_0 : i32, i32
  }
  func.func @transform_3(%arg0: i32) -> (i32, i32) {
    %c0_i32 = arith.constant 0 : i32
    %c0_i32_0 = arith.constant 0 : i32
    %c0_i32_1 = arith.constant 0 : i32
    return %c0_i32, %c0_i32_0 : i32, i32
  }
  func.func @transform_4(%arg0: i32) -> (i32, i32) {
    %c0_i32 = arith.constant 0 : i32
    %c0_i32_0 = arith.constant 0 : i32
    %c0_i32_1 = arith.constant 0 : i32
    return %c0_i32, %c0_i32_0 : i32, i32
  }
  func.func @transform_5(%arg0: i32) -> (i32, i32) {
    %c0_i32 = arith.constant 0 : i32
    %c0_i32_0 = arith.constant 0 : i32
    return %arg0, %c0_i32 : i32, i32
  }
}

</mosaic_0001>

<llo_original>
// kernel: accident_predictor.1
$region0: #{accident_predictor.1}
  #allocation0 [shape = 'u32[]', space=smem, size = 0x4, offset = 0x4, fixed_abs, tag = 'smem constant byte address 0x4 - core index']
  #allocation1 [shape = 'u32[144,128]{1,0:T(1,128)}', space=vmem, size = 0x12000, scoped, tag = 'internal scratch']
  %s0 = inlined_call_operand.vmem [shape: bf16[16,32], index: 0, kind: input, shape index: {}]
  %s1 = inlined_call_operand.vmem [shape: bf16[32,64], index: 1, kind: input, shape index: {}]
  %s2 = inlined_call_operand.vmem [shape: f32[1,64], index: 2, kind: input, shape index: {}]
  %s3 = inlined_call_operand.vmem [shape: bf16[64,128], index: 3, kind: input, shape index: {}]
  %s4 = inlined_call_operand.vmem [shape: f32[1,128], index: 4, kind: input, shape index: {}]
  %s5 = inlined_call_operand.vmem [shape: f32[16,128], index: 5, kind: output, shape index: {}]
  %s6 = sld [smem:[#allocation0]]
  $region30: #{accident_predictor.1} parent=0
    _
  %s8 = ssub.s32 1, %s6
  %s9 = scalar_select 0, %s8, %s6
  // Predicated region
  $region2: #{accident_predictor.1} parent=0 // pred_check
    _
  $region3: #{accident_predictor.1} parent=0 // pred_check_branch
    %11 = sbr.rel (0) target = $region5
  $region4: #{accident_predictor.1} parent=0 // pred_region
    _
  $region5: #{accident_predictor.1} parent=0 // pred_fallthru
    _
  // Predicated region
  $region6: #{accident_predictor.1} parent=0 // pred_check
    _
  $region7: #{accident_predictor.1} parent=0 // pred_check_branch
    %13 = sbr.rel (0) target = $region9
  $region8: #{accident_predictor.1} parent=0 // pred_region
    _
  $region9: #{accident_predictor.1} parent=0 // pred_fallthru
    _
  // Predicated region
  $region10: #{accident_predictor.1} parent=0 // pred_check
    _
  $region11: #{accident_predictor.1} parent=0 // pred_check_branch
    %15 = sbr.rel (0) target = $region13
  $region12: #{accident_predictor.1} parent=0 // pred_region
    _
  $region13: #{accident_predictor.1} parent=0 // pred_fallthru
    _
  // Predicated region
  $region14: #{accident_predictor.1} parent=0 // pred_check
    _
  $region15: #{accident_predictor.1} parent=0 // pred_check_branch
    %17 = sbr.rel (0) target = $region17
  $region16: #{accident_predictor.1} parent=0 // pred_region
    _
  $region17: #{accident_predictor.1} parent=0 // pred_fallthru
    _
  // Predicated region
  $region18: #{accident_predictor.1} parent=0 // pred_check
    _
  $region19: #{accident_predictor.1} parent=0 // pred_check_branch
    %19 = sbr.rel (0) target = $region21
  $region20: #{accident_predictor.1} parent=0 // pred_region
    _
  $region21: #{accident_predictor.1} parent=0 // pred_fallthru
    _
  %v21 = vld [vmem:[%s0] sm:$0xf]
  %v22 = vld [vmem:[%s0 + $0x4] sm:$0xf]
  %v23 = vld [vmem:[%s1] sm:$0xf]
  %v24 = vld [vmem:[%s1 + $0x4] sm:$0xf]
  %v25 = vld [vmem:[%s1 + $0x8] sm:$0xf]
  %v26 = vld [vmem:[%s1 + $0xc] sm:$0xf]
  %v27 = vld [vmem:[%s2] sm:$0x1]
  %v29 = vlaneseq
  %v30 = vshrl.u32 %v29, 7
  %v31 = vsub.s32 0, %v30
  %v32 = vrot.slane %v27, %v31
  %v36 = vunpack.c.l.b16 %v21
  %v37 = vunpack.c.l.b16 %v22
  %v38 = vpack.c.b16 %v37, %v36
  %v43 = vunpack.c.l.b16 %v23
  %v44 = vunpack.c.l.b16 %v24
  %v45 = vunpack.c.l.b16 %v25
  %v46 = vunpack.c.l.b16 %v26
  %v47 = vpack.c.b16 %v44, %v43
  %v48 = vpack.c.b16 %v46, %v45
  %vm51 = vcmask 261120
  %v53 = vsel %vm51, %v38, 0
  %55 = vmatprep.subr.bf16.mxu0 0
  %56 = vmatpush1.bf16.msra.mxu0 %v47
  %57 = vmatprep.subr.bf16.mxu0 0
  %58 = vmatpush1.bf16.msra.mxu0 %v48
  %59 = vmatprep.subr.bf16.mxu0 0
  %60 = vmatpush1.bf16.msra.mxu0 0
  %61 = vmatprep.subr.bf16.mxu0 0
  %62 = vmatpush1.bf16.msra.mxu0 0
  %63 = vmatprep.subr.bf16.mxu0 0
  %64 = vmatpush1.bf16.msra.mxu0 0
  %65 = vmatprep.subr.bf16.mxu0 0
  %66 = vmatpush1.bf16.msra.mxu0 0
  %67 = vmatprep.subr.bf16.mxu0 0
  %68 = vmatpush1.bf16.msra.mxu0 0
  %69 = vmatprep.subr.bf16.mxu0 0
  %70 = vmatpush1.bf16.msra.mxu0 0
  %71 = vmatprep.subr.bf16.mxu0 0
  %72 = vmatpush1.bf16.msra.mxu0 0
  %73 = vmatprep.subr.bf16.mxu0 0
  %74 = vmatpush1.bf16.msra.mxu0 0
  %75 = vmatprep.subr.bf16.mxu0 0
  %76 = vmatpush1.bf16.msra.mxu0 0
  %77 = vmatprep.subr.bf16.mxu0 0
  %78 = vmatpush1.bf16.msra.mxu0 0
  %79 = vmatprep.subr.bf16.mxu0 0
  %80 = vmatpush1.bf16.msra.mxu0 0
  %81 = vmatprep.subr.bf16.mxu0 0
  %82 = vmatpush1.bf16.msra.mxu0 0
  %83 = vmatprep.subr.bf16.mxu0 0
  %84 = vmatpush1.bf16.msra.mxu0 0
  %85 = vmatprep.subr.bf16.mxu0 0
  %86 = vmatpush1.bf16.msra.mxu0 0
  %87 = vmatprep.mubr.bf16.mxu0 0
  %88 = vmatmul.mubr.bf16.gmra.mrb[0].mxu0 %v53
  %v89 = vpop.f32.mrb[0].mxu0
  %v90 = vadd.f32 %v32, %v89
  %v91 = vpop.f32.mrb[0].mxu0
  %v92 = vpop.f32.mrb[0].mxu0
  %v93 = vadd.f32 %v32, %v92
  %v94 = vpop.f32.mrb[0].mxu0
  %95 = vdwg.mxu0
  %v96 = vmax.f32 %v90, 0.0
  %v97 = vmax.f32 %v93, 0.0
  %v98 = vpack.c.bf16 %v97, %v96
  %v99 = vld [vmem:[%s3] sm:$0xf]
  %v100 = vld [vmem:[%s3 + $0x4] sm:$0xf]
  %v101 = vld [vmem:[%s3 + $0x8] sm:$0xf]
  %v102 = vld [vmem:[%s3 + $0xc] sm:$0xf]
  %v103 = vld [vmem:[%s3 + $0x10] sm:$0xf]
  %v104 = vld [vmem:[%s3 + $0x14] sm:$0xf]
  %v105 = vld [vmem:[%s3 + $0x18] sm:$0xf]
  %v106 = vld [vmem:[%s3 + $0x1c] sm:$0xf]
  %v107 = vld [vmem:[%s4] sm:$0x1]
  %v109 = vlaneseq
  %v110 = vshrl.u32 %v109, 7
  %v111 = vsub.s32 0, %v110
  %v112 = vrot.slane %v107, %v111
  %v122 = vunpack.c.l.b16 %v99
  %v123 = vunpack.c.l.b16 %v100
  %v124 = vunpack.c.l.b16 %v101
  %v125 = vunpack.c.l.b16 %v102
  %v126 = vunpack.c.l.b16 %v103
  %v127 = vunpack.c.l.b16 %v104
  %v128 = vunpack.c.l.b16 %v105
  %v129 = vunpack.c.l.b16 %v106
  %v130 = vpack.c.b16 %v123, %v122
  %v131 = vpack.c.b16 %v125, %v124
  %v132 = vpack.c.b16 %v127, %v126
  %v133 = vpack.c.b16 %v129, %v128
  %vm138 = vcmask 523264
  %v140 = vsel %vm138, %v98, 0
  %142 = vmatprep.subr.bf16.mxu0 0
  %143 = vmatpush1.bf16.msra.mxu0 %v130
  %144 = vmatprep.subr.bf16.mxu0 0
  %145 = vmatpush1.bf16.msra.mxu0 %v131
  %146 = vmatprep.subr.bf16.mxu0 0
  %147 = vmatpush1.bf16.msra.mxu0 %v132
  %148 = vmatprep.subr.bf16.mxu0 0
  %149 = vmatpush1.bf16.msra.mxu0 %v133
  %150 = vmatprep.subr.bf16.mxu0 0
  %151 = vmatpush1.bf16.msra.mxu0 0
  %152 = vmatprep.subr.bf16.mxu0 0
  %153 = vmatpush1.bf16.msra.mxu0 0
  %154 = vmatprep.subr.bf16.mxu0 0
  %155 = vmatpush1.bf16.msra.mxu0 0
  %156 = vmatprep.subr.bf16.mxu0 0
  %157 = vmatpush1.bf16.msra.mxu0 0
  %158 = vmatprep.subr.bf16.mxu0 0
  %159 = vmatpush1.bf16.msra.mxu0 0
  %160 = vmatprep.subr.bf16.mxu0 0
  %161 = vmatpush1.bf16.msra.mxu0 0
  %162 = vmatprep.subr.bf16.mxu0 0
  %163 = vmatpush1.bf16.msra.mxu0 0
  %164 = vmatprep.subr.bf16.mxu0 0
  %165 = vmatpush1.bf16.msra.mxu0 0
  %166 = vmatprep.subr.bf16.mxu0 0
  %167 = vmatpush1.bf16.msra.mxu0 0
  %168 = vmatprep.subr.bf16.mxu0 0
  %169 = vmatpush1.bf16.msra.mxu0 0
  %170 = vmatprep.subr.bf16.mxu0 0
  %171 = vmatpush1.bf16.msra.mxu0 0
  %172 = vmatprep.subr.bf16.mxu0 0
  %173 = vmatpush1.bf16.msra.mxu0 0
  %174 = vmatprep.mubr.bf16.mxu0 0
  %175 = vmatmul.mubr.bf16.gmra.mrb[0].mxu0 %v140
  %v176 = vpop.f32.mrb[0].mxu0
  %v177 = vadd.f32 %v112, %v176
  %v178 = vpop.f32.mrb[0].mxu0
  %v179 = vpop.f32.mrb[0].mxu0
  %v180 = vadd.f32 %v112, %v179
  %v181 = vpop.f32.mrb[0].mxu0
  %182 = vdwg.mxu0
  %183 = vst [vmem:[%s5] sm:$0xff] %v177
  %184 = vst [vmem:[%s5 + $0x8] sm:$0xff] %v180
  // Predicated region
  $region22: #{accident_predictor.1} parent=0 // pred_check
    _
  $region23: #{accident_predictor.1} parent=0 // pred_check_branch
    %186 = sbr.rel (0) target = $region25
  $region24: #{accident_predictor.1} parent=0 // pred_region
    _
  $region25: #{accident_predictor.1} parent=0 // pred_fallthru
    _
  // Predicated region
  $region26: #{accident_predictor.1} parent=0 // pred_check
    _
  $region27: #{accident_predictor.1} parent=0 // pred_check_branch
    %188 = sbr.rel (0) target = $region29
  $region28: #{accident_predictor.1} parent=0 // pred_region
    _
  $region29: #{accident_predictor.1} parent=0 // pred_fallthru
    _

</llo_original>
